<compile_context>
chip_gen: v5e
topology: v5e:2x2
jax: 0.10.0
libtpu: 0.0.40
codegen_flags: <defaults>
</compile_context>

<pallas_src>
import functools

import numpy as np

import jax
import jax.numpy as jnp
from jax.experimental import pallas as pl
from jax.experimental.pallas import tpu as pltpu


# -----------------------------------------------------------------------------
# Kernel: one M-tile of flattened tubelets x resident projection weight.
# -----------------------------------------------------------------------------
def _tubelet_proj_kernel(x_ref, w_ref, b_ref, o_ref):
    # MXU matmul with f32 accumulation, f32 bias add, cast to the output dtype.
    acc = jnp.dot(x_ref[...], w_ref[...], preferred_element_type=jnp.float32)
    o_ref[...] = (acc + b_ref[...]).astype(o_ref.dtype)


def _vmem_capacity_bytes():
    """Physical VMEM per TensorCore; conservative fallback if unqueryable."""
    try:
        return int(pltpu.get_tpu_info().vmem_capacity_bytes)
    except Exception:
        return 64 * 1024 * 1024  # v7x per-core size: the safe lower bound


def _pick_m_tile(M, big_vmem):
    """Largest comfortable M-tile; prefer an even grid for v7x 2-TC balance."""
    cap = 2048 if big_vmem else 1024
    if M <= 512:
        return M                    # one grid step; full-dim block is always legal
    if M < 2 * cap:
        return 512                  # a few steps -> the pipeline still overlaps
    for tm in (cap, cap - 128, cap - 256):
        if pl.cdiv(M, tm) % 2 == 0:
            return tm
    return cap


def tubelet_embeddings(pixel_values, weight, bias, tubelet_size,
                       out_dtype=None, compute_dtype=jnp.bfloat16):
    """
    pixel_values : (B, T, C, H, W)
    weight       : (hidden, C, kt, kh, kw)   (PyTorch Conv3d layout)
    bias         : (hidden,)
    returns      : (B, seq_len, hidden)
    """
    B, T, C, H, W = pixel_values.shape
    kt, kh, kw = tubelet_size
    hidden = weight.shape[0]
    Tp, Hp, Wp = T // kt, H // kh, W // kw
    num_patches = Tp * Hp * Wp
    K = C * kt * kh * kw
    M = B * num_patches
    if out_dtype is None:
        out_dtype = pixel_values.dtype

    # ---- layout glue (XLA): ONE fused cast+transpose pass over the video ----
    # Flatten K in (kt, C, kh, kw) order so the 8-D view needs no leading
    # permute; the matching permutation goes on the tiny weight instead.
    x = pixel_values.astype(compute_dtype)
    x = x.reshape(B, Tp, kt, C, Hp, kh, Wp, kw)
    x = jnp.transpose(x, (0, 1, 4, 6, 2, 3, 5, 7))     # (B,Tp,Hp,Wp,kt,C,kh,kw)
    patches = x.reshape(M, K)
    # TODO(synk): pull this im2col into the kernel once Mosaic reliably lowers
    # the lane-crossing relayout; it removes ~30-45% of end-to-end HBM traffic.

    # Weight (hidden, C, kt, kh, kw) -> (K, hidden) in matching (kt,C,kh,kw) order.
    w2d = jnp.transpose(weight, (0, 2, 1, 3, 4)).reshape(hidden, K).T
    w2d = w2d.astype(compute_dtype)
    b2d = bias.reshape(1, hidden).astype(jnp.float32)

    # Lane-dense output: pad hidden to a multiple of 128 (unmasked vst stores).
    Np = ((hidden + 127) // 128) * 128
    if Np != hidden:
        w2d = jnp.pad(w2d, ((0, 0), (0, Np - hidden)))
        b2d = jnp.pad(b2d, ((0, 0), (0, Np - hidden)))

    big_vmem = _vmem_capacity_bytes() >= 128 * 1024 * 1024   # v5e/v6e yes, v7x no
    tm = _pick_m_tile(M, big_vmem)
    grid_m = pl.cdiv(M, tm)

    cbytes = np.dtype(compute_dtype).itemsize
    obytes = np.dtype(out_dtype).itemsize
    cost = pl.CostEstimate(
        flops=2 * M * K * Np,
        transcendentals=0,
        bytes_accessed=M * K * cbytes + K * Np * cbytes + Np * 4 + M * Np * obytes,
    )

    out2d = pl.pallas_call(
        _tubelet_proj_kernel,
        out_shape=jax.ShapeDtypeStruct((M, Np), out_dtype),
        grid_spec=pltpu.PrefetchScalarGridSpec(
            num_scalar_prefetch=0,
            grid=(grid_m,),
            in_specs=[
                # streamed patch tile (double-buffered by default)
                pl.BlockSpec((tm, K), lambda i: (i, 0)),
                # resident operands: constant index map -> one buffer is enough
                pl.BlockSpec((K, Np), lambda i: (0, 0),
                             pipeline_mode=pl.Buffered(1)),
                pl.BlockSpec((1, Np), lambda i: (0, 0),
                             pipeline_mode=pl.Buffered(1)),
            ],
            out_specs=pl.BlockSpec((tm, Np), lambda i: (i, 0)),
        ),
        compiler_params=pltpu.CompilerParams(
            dimension_semantics=("parallel",),        # shards M across v7x TCs
            vmem_limit_bytes=(64 if big_vmem else 32) * 1024 * 1024,
        ),
        cost_estimate=cost,
    )(patches, w2d, b2d)

    if Np != hidden:
        out2d = out2d[:, :hidden]
    return out2d.reshape(B, num_patches, hidden)


def _reference(pixel_values, weight, bias, tubelet_size):
    """Pure-JAX f32 reference of the PyTorch forward (Conv3d, stride==kernel)."""
    x = jnp.transpose(pixel_values, (0, 2, 1, 3, 4))      # (B,C,T,H,W)
    out = jax.lax.conv_general_dilated(
        x, weight,
        window_strides=tubelet_size,
        padding="VALID",
        dimension_numbers=("NCTHW", "OITHW", "NCTHW"),
    )
    out = out + bias.reshape(1, -1, 1, 1, 1)
    B, hid = out.shape[0], out.shape[1]
    out = out.reshape(B, hid, -1)                         # flatten(2)
    return jnp.transpose(out, (0, 2, 1))                  # transpose(1,2)


if __name__ == "__main__":
    # Small synthetic config consistent with the module:
    #   num_frames=8, num_channels=3, image_size=16, tubelet_size=(2,4,4), hidden=32
    B, T, C, H, W = 2, 8, 3, 16, 16
    tubelet_size = (2, 4, 4)
    hidden = 32

    key = jax.random.PRNGKey(0)
    k_x, k_w, k_b = jax.random.split(key, 3)
    pixel_values = jax.random.normal(k_x, (B, T, C, H, W), dtype=jnp.float32)
    weight = 0.02 * jax.random.normal(
        k_w, (hidden, C) + tubelet_size, dtype=jnp.float32)
    bias = 0.01 * jax.random.normal(k_b, (hidden,), dtype=jnp.float32)

    fwd = jax.jit(functools.partial(tubelet_embeddings, tubelet_size=tubelet_size))
    out = jax.block_until_ready(fwd(pixel_values, weight, bias))

    ref = _reference(pixel_values, weight, bias, tubelet_size)
    seq_len = (T // tubelet_size[0]) * (H // tubelet_size[1]) * (W // tubelet_size[2])
    assert out.shape == (B, seq_len, hidden), out.shape
    # bf16 matmul inputs (f32 accumulation) compared against an f32 conv
    # reference -> correspondingly loose tolerance.
    max_err = float(jnp.max(jnp.abs(out - ref)))
    assert jnp.allclose(out, ref, atol=3e-2, rtol=3e-2), max_err

    print("KERNEL_OK")
</pallas_src>

<mosaic_0001>
module attributes {stable_mosaic.version = 11 : i64} {
  func.func @_tubelet_proj_kernel(%arg0: i32, %arg1: memref<128x96xbf16, #tpu.memory_space<vmem>>, %arg2: memref<96x128xbf16, #tpu.memory_space<vmem>>, %arg3: memref<1x128xf32, #tpu.memory_space<vmem>>, %arg4: memref<128x128xf32, #tpu.memory_space<vmem>>) attributes {dimension_semantics = [#tpu.dimension_semantics<parallel>], iteration_bounds = array<i64: 1>, scalar_prefetch = 0 : i64, scratch_operands = 0 : i64, tpu.core_type = #tpu.core_type<tc>, window_params = [{transform_indices = @transform_0, window_bounds = array<i64: 128, 96>}, {pipeline_mode = #tpu.pipeline_mode<synchronous>, transform_indices = @transform_1, window_bounds = array<i64: 96, 128>}, {pipeline_mode = #tpu.pipeline_mode<synchronous>, transform_indices = @transform_2, window_bounds = array<i64: 1, 128>}, {transform_indices = @transform_3, window_bounds = array<i64: 128, 128>}]} {
    %c0 = arith.constant 0 : index
    %c0_0 = arith.constant 0 : index
    %0 = vector.load %arg1[%c0, %c0_0] : memref<128x96xbf16, #tpu.memory_space<vmem>>, vector<128x96xbf16>
    %c0_1 = arith.constant 0 : index
    %c0_2 = arith.constant 0 : index
    %1 = vector.load %arg2[%c0_1, %c0_2] : memref<96x128xbf16, #tpu.memory_space<vmem>>, vector<96x128xbf16>
    %cst = arith.constant dense<0.000000e+00> : vector<128x128xf32>
    %2 = tpu.matmul %0, %1, %cst {dimension_numbers = #tpu.dot_dimension_numbers<[1], [0], [0], [1], [0, 0, 1, 1], [], []>} : vector<128x96xbf16>, vector<96x128xbf16>, vector<128x128xf32> -> vector<128x128xf32>
    %c0_3 = arith.constant 0 : index
    %c0_4 = arith.constant 0 : index
    %3 = vector.load %arg3[%c0_3, %c0_4] : memref<1x128xf32, #tpu.memory_space<vmem>>, vector<1x128xf32>
    %4 = vector.broadcast %3 : vector<1x128xf32> to vector<128x128xf32>
    %5 = arith.addf %2, %4 : vector<128x128xf32>
    %c0_5 = arith.constant 0 : index
    %c0_6 = arith.constant 0 : index
    %6 = vector.load %arg4[%c0_5, %c0_6] : memref<128x128xf32, #tpu.memory_space<vmem>>, vector<128x128xf32>
    tpu.vector_store %arg4[%c0_5, %c0_6], %5 {strides = array<i32>} : memref<128x128xf32, #tpu.memory_space<vmem>>, vector<128x128xf32>,
    return
  }
  func.func @transform_0(%arg0: i32) -> (i32, i32) {
    %c0_i32 = arith.constant 0 : i32
    %c0_i32_0 = arith.constant 0 : i32
    return %arg0, %c0_i32 : i32, i32
  }
  func.func @transform_1(%arg0: i32) -> (i32, i32) {
    %c0_i32 = arith.constant 0 : i32
    %c0_i32_0 = arith.constant 0 : i32
    %c0_i32_1 = arith.constant 0 : i32
    return %c0_i32, %c0_i32_0 : i32, i32
  }
  func.func @transform_2(%arg0: i32) -> (i32, i32) {
    %c0_i32 = arith.constant 0 : i32
    %c0_i32_0 = arith.constant 0 : i32
    %c0_i32_1 = arith.constant 0 : i32
    return %c0_i32, %c0_i32_0 : i32, i32
  }
  func.func @transform_3(%arg0: i32) -> (i32, i32) {
    %c0_i32 = arith.constant 0 : i32
    %c0_i32_0 = arith.constant 0 : i32
    return %arg0, %c0_i32 : i32, i32
  }
}

</mosaic_0001>

<llo_original>
// kernel: tubelet_embeddings.1
$region0: #{tubelet_embeddings.1}
  #allocation0 [shape = 'u32[]', space=smem, size = 0x4, offset = 0x4, fixed_abs, tag = 'smem constant byte address 0x4 - core index']
  #allocation1 [shape = 'u32[72,128]{1,0:T(1,128)}', space=vmem, size = 0x9000, scoped, tag = 'internal scratch']
  %s0 = inlined_call_operand.vmem [shape: bf16[128,96], index: 0, kind: input, shape index: {}]
  %s1 = inlined_call_operand.vmem [shape: bf16[96,128], index: 1, kind: input, shape index: {}]
  %s2 = inlined_call_operand.vmem [shape: f32[1,128], index: 2, kind: input, shape index: {}]
  %s3 = inlined_call_operand.vmem [shape: f32[128,128], index: 3, kind: output, shape index: {}]
  %s4 = sld [smem:[#allocation0]]
  $region22: #{tubelet_embeddings.1} parent=0
    _
  %s6 = ssub.s32 1, %s4
  %s7 = scalar_select 0, %s6, %s4
  // Predicated region
  $region2: #{tubelet_embeddings.1} parent=0 // pred_check
    _
  $region3: #{tubelet_embeddings.1} parent=0 // pred_check_branch
    %9 = sbr.rel (0) target = $region5
  $region4: #{tubelet_embeddings.1} parent=0 // pred_region
    _
  $region5: #{tubelet_embeddings.1} parent=0 // pred_fallthru
    _
  // Predicated region
  $region6: #{tubelet_embeddings.1} parent=0 // pred_check
    _
  $region7: #{tubelet_embeddings.1} parent=0 // pred_check_branch
    %11 = sbr.rel (0) target = $region9
  $region8: #{tubelet_embeddings.1} parent=0 // pred_region
    _
  $region9: #{tubelet_embeddings.1} parent=0 // pred_fallthru
    _
  // Predicated region
  $region10: #{tubelet_embeddings.1} parent=0 // pred_check
    _
  $region11: #{tubelet_embeddings.1} parent=0 // pred_check_branch
    %13 = sbr.rel (0) target = $region13
  $region12: #{tubelet_embeddings.1} parent=0 // pred_region
    _
  $region13: #{tubelet_embeddings.1} parent=0 // pred_fallthru
    _
  %v15 = vld [vmem:[%s0] sm:$0xf]
  %v16 = vld [vmem:[%s0 + $0x4] sm:$0xf]
  %v17 = vld [vmem:[%s0 + $0x8] sm:$0xf]
  %v18 = vld [vmem:[%s0 + $0xc] sm:$0xf]
  %v19 = vld [vmem:[%s0 + $0x10] sm:$0xf]
  %v20 = vld [vmem:[%s0 + $0x14] sm:$0xf]
  %v21 = vld [vmem:[%s0 + $0x18] sm:$0xf]
  %v22 = vld [vmem:[%s0 + $0x1c] sm:$0xf]
  %v23 = vld [vmem:[%s0 + $0x20] sm:$0xf]
  %v24 = vld [vmem:[%s0 + $0x24] sm:$0xf]
  %v25 = vld [vmem:[%s0 + $0x28] sm:$0xf]
  %v26 = vld [vmem:[%s0 + $0x2c] sm:$0xf]
  %v27 = vld [vmem:[%s0 + $0x30] sm:$0xf]
  %v28 = vld [vmem:[%s0 + $0x34] sm:$0xf]
  %v29 = vld [vmem:[%s0 + $0x38] sm:$0xf]
  %v30 = vld [vmem:[%s0 + $0x3c] sm:$0xf]
  %v31 = vld [vmem:[%s1] sm:$0xf]
  %v32 = vld [vmem:[%s1 + $0x4] sm:$0xf]
  %v33 = vld [vmem:[%s1 + $0x8] sm:$0xf]
  %v34 = vld [vmem:[%s1 + $0xc] sm:$0xf]
  %v35 = vld [vmem:[%s1 + $0x10] sm:$0xf]
  %v36 = vld [vmem:[%s1 + $0x14] sm:$0xf]
  %v37 = vld [vmem:[%s1 + $0x18] sm:$0xf]
  %v38 = vld [vmem:[%s1 + $0x1c] sm:$0xf]
  %v39 = vld [vmem:[%s1 + $0x20] sm:$0xf]
  %v40 = vld [vmem:[%s1 + $0x24] sm:$0xf]
  %v41 = vld [vmem:[%s1 + $0x28] sm:$0xf]
  %v42 = vld [vmem:[%s1 + $0x2c] sm:$0xf]
  %v43 = vld [vmem:[%s2] sm:$0x1]
  %v45 = vperm.slane %v43, 0
  %v63 = vunpack.c.l.b16 %v15
  %v64 = vunpack.c.l.b16 %v16
  %v65 = vunpack.c.l.b16 %v17
  %v66 = vunpack.c.l.b16 %v18
  %v67 = vunpack.c.l.b16 %v19
  %v68 = vunpack.c.l.b16 %v20
  %v69 = vunpack.c.l.b16 %v21
  %v70 = vunpack.c.l.b16 %v22
  %v71 = vunpack.c.l.b16 %v23
  %v72 = vunpack.c.l.b16 %v24
  %v73 = vunpack.c.l.b16 %v25
  %v74 = vunpack.c.l.b16 %v26
  %v75 = vunpack.c.l.b16 %v27
  %v76 = vunpack.c.l.b16 %v28
  %v77 = vunpack.c.l.b16 %v29
  %v78 = vunpack.c.l.b16 %v30
  %v79 = vpack.c.b16 %v64, %v63
  %v80 = vpack.c.b16 %v66, %v65
  %v81 = vpack.c.b16 %v68, %v67
  %v82 = vpack.c.b16 %v70, %v69
  %v83 = vpack.c.b16 %v72, %v71
  %v84 = vpack.c.b16 %v74, %v73
  %v85 = vpack.c.b16 %v76, %v75
  %v86 = vpack.c.b16 %v78, %v77
  %v99 = vunpack.c.l.b16 %v31
  %v100 = vunpack.c.l.b16 %v32
  %v101 = vunpack.c.l.b16 %v33
  %v102 = vunpack.c.l.b16 %v34
  %v103 = vunpack.c.l.b16 %v35
  %v104 = vunpack.c.l.b16 %v36
  %v105 = vunpack.c.l.b16 %v37
  %v106 = vunpack.c.l.b16 %v38
  %v107 = vunpack.c.l.b16 %v39
  %v108 = vunpack.c.l.b16 %v40
  %v109 = vunpack.c.l.b16 %v41
  %v110 = vunpack.c.l.b16 %v42
  %v111 = vpack.c.b16 %v100, %v99
  %v112 = vpack.c.b16 %v102, %v101
  %v113 = vpack.c.b16 %v104, %v103
  %v114 = vpack.c.b16 %v106, %v105
  %v115 = vpack.c.b16 %v108, %v107
  %v116 = vpack.c.b16 %v110, %v109
  %vm123 = vcmask 785408
  %v125 = vsel %vm123, %v79, 0
  %v128 = vsel %vm123, %v80, 0
  %v131 = vsel %vm123, %v81, 0
  %v134 = vsel %vm123, %v82, 0
  %v137 = vsel %vm123, %v83, 0
  %v140 = vsel %vm123, %v84, 0
  %v143 = vsel %vm123, %v85, 0
  %v146 = vsel %vm123, %v86, 0
  %148 = vmatpush.bf16.msra.mxu0 0
  %149 = vmatpush.bf16.msra.mxu0 0
  %150 = vmatpush.bf16.msra.mxu0 %v116
  %151 = vmatpush.bf16.msra.mxu0 %v115
  %152 = vmatpush.bf16.msra.mxu0 %v114
  %153 = vmatpush.bf16.msra.mxu0 %v113
  %154 = vmatpush.bf16.msra.mxu0 %v112
  %155 = vmatpush.bf16.msra.mxu0 %v111
  %156 = vmatmul.bf16.gmra.mxu0 %v125
  %v157 = vpop.f32.mrf.mxu0
  %v158 = vadd.f32 %v45, %v157
  %v159 = vpop.f32.mrf.mxu0
  %v160 = vadd.f32 %v45, %v159
  %161 = vmatmul.bf16.gmra.mxu0 %v128
  %v162 = vpop.f32.mrf.mxu0
  %v163 = vadd.f32 %v45, %v162
  %v164 = vpop.f32.mrf.mxu0
  %v165 = vadd.f32 %v45, %v164
  %166 = vmatmul.bf16.gmra.mxu0 %v131
  %v167 = vpop.f32.mrf.mxu0
  %v168 = vadd.f32 %v45, %v167
  %v169 = vpop.f32.mrf.mxu0
  %v170 = vadd.f32 %v45, %v169
  %171 = vmatmul.bf16.gmra.mxu0 %v134
  %v172 = vpop.f32.mrf.mxu0
  %v173 = vadd.f32 %v45, %v172
  %v174 = vpop.f32.mrf.mxu0
  %v175 = vadd.f32 %v45, %v174
  %176 = vmatmul.bf16.gmra.mxu0 %v137
  %v177 = vpop.f32.mrf.mxu0
  %v178 = vadd.f32 %v45, %v177
  %v179 = vpop.f32.mrf.mxu0
  %v180 = vadd.f32 %v45, %v179
  %181 = vmatmul.bf16.gmra.mxu0 %v140
  %v182 = vpop.f32.mrf.mxu0
  %v183 = vadd.f32 %v45, %v182
  %v184 = vpop.f32.mrf.mxu0
  %v185 = vadd.f32 %v45, %v184
  %186 = vmatmul.bf16.gmra.mxu0 %v143
  %v187 = vpop.f32.mrf.mxu0
  %v188 = vadd.f32 %v45, %v187
  %v189 = vpop.f32.mrf.mxu0
  %v190 = vadd.f32 %v45, %v189
  %191 = vmatmul.bf16.gmra.mxu0 %v146
  %v192 = vpop.f32.mrf.mxu0
  %v193 = vadd.f32 %v45, %v192
  %v194 = vpop.f32.mrf.mxu0
  %v195 = vadd.f32 %v45, %v194
  %196 = vdwg.mxu0
  %197 = vst [vmem:[%s3] sm:$0xff] %v158
  %198 = vst [vmem:[%s3 + $0x8] sm:$0xff] %v160
  %199 = vst [vmem:[%s3 + $0x10] sm:$0xff] %v163
  %200 = vst [vmem:[%s3 + $0x18] sm:$0xff] %v165
  %201 = vst [vmem:[%s3 + $0x20] sm:$0xff] %v168
  %202 = vst [vmem:[%s3 + $0x28] sm:$0xff] %v170
  %203 = vst [vmem:[%s3 + $0x30] sm:$0xff] %v173
  %204 = vst [vmem:[%s3 + $0x38] sm:$0xff] %v175
  %205 = vst [vmem:[%s3 + $0x40] sm:$0xff] %v178
  %206 = vst [vmem:[%s3 + $0x48] sm:$0xff] %v180
  %207 = vst [vmem:[%s3 + $0x50] sm:$0xff] %v183
  %208 = vst [vmem:[%s3 + $0x58] sm:$0xff] %v185
  %209 = vst [vmem:[%s3 + $0x60] sm:$0xff] %v188
  %210 = vst [vmem:[%s3 + $0x68] sm:$0xff] %v190
  %211 = vst [vmem:[%s3 + $0x70] sm:$0xff] %v193
  %212 = vst [vmem:[%s3 + $0x78] sm:$0xff] %v195
  // Predicated region
  $region14: #{tubelet_embeddings.1} parent=0 // pred_check
    _
  $region15: #{tubelet_embeddings.1} parent=0 // pred_check_branch
    %214 = sbr.rel (0) target = $region17
  $region16: #{tubelet_embeddings.1} parent=0 // pred_region
    _
  $region17: #{tubelet_embeddings.1} parent=0 // pred_fallthru
    _
  // Predicated region
  $region18: #{tubelet_embeddings.1} parent=0 // pred_check
    _
  $region19: #{tubelet_embeddings.1} parent=0 // pred_check_branch
    %216 = sbr.rel (0) target = $region21
  $region20: #{tubelet_embeddings.1} parent=0 // pred_region
    _
  $region21: #{tubelet_embeddings.1} parent=0 // pred_fallthru
    _

</llo_original>
